<compile_context>
chip_gen: v6e
topology: v6e:2x2x1
jax: 0.10.0
libtpu: 0.0.40
codegen_flags: <defaults>
</compile_context>

<pallas_src>
import jax
import jax.numpy as jnp
from jax.experimental import pallas as pl
from jax.experimental.pallas import tpu as pltpu


def _make_gem_kernel(eps: float, hw: int):
    inv_hw = 1.0 / float(hw)
    tiny = float(jnp.finfo(jnp.float32).tiny)

    def gem_kernel(x_ref, p_ref, o_ref, acc_ref):
        # x_ref: (TR, THW) f32   p_ref: (TR, 1) f32
        # o_ref: (TR, 1)  f32    acc_ref: (TR, 1) f32 scratch (sum of x^p)
        k = pl.program_id(1)

        @pl.when(k == 0)
        def _init():
            acc_ref[...] = jnp.zeros_like(acc_ref)

        x = x_ref[...]
        p = p_ref[...]
        xc = jnp.maximum(x, eps)                      # clamp(min=eps)
        # x^p == exp(p * log(x))  (x > 0 after clamp)
        xp = jnp.exp(p * jnp.log(xc))
        acc_ref[...] += jnp.sum(xp, axis=-1, keepdims=True)

        @pl.when(k == pl.num_programs(1) - 1)
        def _finalize():
            m = acc_ref[...] * inv_hw                 # avg_pool over H*W
            m = jnp.maximum(m, tiny)                  # guard log(-inf) underflow
            inv_p = pl.reciprocal(p, approx=False)
            # m^(1/p) == exp(log(m)/p)
            o_ref[...] = jnp.exp(jnp.log(m) * inv_p).astype(o_ref.dtype)

    return gem_kernel


def _choose_tiles(R: int, HW: int):
    """Pick (tile_r, tile_hw) honoring (8,128) tiling and a ~4 MiB block target."""
    # ---- lane / reduction tile over H*W ----
    MAX_HW_TILE = 16384                       # 64 KiB per row (f32)
    if HW % 128 == 0 and HW > MAX_HW_TILE:
        tile_hw = MAX_HW_TILE
        while HW % tile_hw != 0:              # largest multiple-of-128 divisor <= cap
            tile_hw -= 128
    else:
        tile_hw = HW                          # full-extent block (always legal)

    # ---- row tile: ~4 MiB x-block (2-8 MiB sweet spot; v7x-safe w/ dbl buffering)
    TARGET_BLOCK_BYTES = 4 << 20
    tile_r = TARGET_BLOCK_BYTES // (tile_hw * 4)
    tile_r = max(8, (tile_r // 8) * 8)        # multiple of 8 (f32 sublane)
    r_pad8 = ((R + 7) // 8) * 8
    tile_r = min(tile_r, r_pad8)
    return tile_r, tile_hw


def gem_pallas(x: jax.Array, p: jax.Array, eps: float = 1e-6) -> jax.Array:
    """x: [B, C, H, W]; p: [1] (learnable exponent) -> [B, C, 1, 1]."""
    B, C, H, W = x.shape
    R, HW = B * C, H * W

    tile_r, tile_hw = _choose_tiles(R, HW)
    n_row_tiles = -(-R // tile_r)             # cdiv
    R_pad = n_row_tiles * tile_r
    n_hw_tiles = HW // tile_hw

    x2d = x.reshape(R, HW).astype(jnp.float32)
    if R_pad > R:
        # Pad rows with 1.0: clamp->1, log->0, exp->1; all finite, discarded later.
        x2d = jnp.concatenate(
            [x2d, jnp.ones((R_pad - R, HW), jnp.float32)], axis=0)

    p2d = jnp.broadcast_to(p.astype(jnp.float32).reshape(1, 1), (R_pad, 1))

    kernel = _make_gem_kernel(eps, HW)

    out2d = pl.pallas_call(
        kernel,
        out_shape=jax.ShapeDtypeStruct((R_pad, 1), jnp.float32),
        grid=(n_row_tiles, n_hw_tiles),
        in_specs=[
            pl.BlockSpec((tile_r, tile_hw), lambda i, k: (i, k)),
            pl.BlockSpec((tile_r, 1), lambda i, k: (i, 0)),
        ],
        out_specs=pl.BlockSpec((tile_r, 1), lambda i, k: (i, 0)),
        scratch_shapes=[pltpu.VMEM((tile_r, 1), jnp.float32)],
        compiler_params=pltpu.CompilerParams(
            dimension_semantics=("parallel", "arbitrary")),
    )(x2d, p2d)

    return out2d[:R].reshape(B, C, 1, 1).astype(x.dtype)


def gem_ref(x, p, eps=1e-6):
    # pure-JAX reference (matches F.avg_pool2d(x.clamp(eps).pow(p), (H,W)).pow(1/p))
    pb = p.reshape(1, 1, 1, 1)
    xc = jnp.maximum(x, eps)
    m = jnp.mean(xc ** pb, axis=(-2, -1), keepdims=True)
    return m ** (1.0 / pb)


if __name__ == "__main__":
    B, C, H, W = 2, 4, 16, 16

    key = jax.random.PRNGKey(0)
    kx, _ = jax.random.split(key)
    x = jax.random.uniform(kx, (B, C, H, W), dtype=jnp.float32,
                           minval=-0.5, maxval=2.0)

    # nn.Parameter(torch.ones(1) * p), p = 3
    p = jnp.ones((1,), dtype=jnp.float32) * 3.0

    out = gem_pallas(x, p, eps=1e-6)
    out = jax.block_until_ready(out)

    ref = gem_ref(x, p, eps=1e-6)
    assert out.shape == (B, C, 1, 1)
    assert jnp.allclose(out, ref, rtol=1e-4, atol=1e-5), (out, ref)

    print("KERNEL_OK")
</pallas_src>

<mosaic_0001>
module attributes {stable_mosaic.version = 11 : i64} {
  func.func @gem_kernel(%arg0: i32, %arg1: i32, %arg2: memref<8x256xf32, #tpu.memory_space<vmem>>, %arg3: memref<8x1xf32, #tpu.memory_space<vmem>>, %arg4: memref<8x1xf32, #tpu.memory_space<vmem>>, %arg5: memref<8x1xf32, #tpu.memory_space<vmem>>) attributes {dimension_semantics = [#tpu.dimension_semantics<parallel>, #tpu.dimension_semantics<arbitrary>], iteration_bounds = array<i64: 1, 1>, scalar_prefetch = 0 : i64, scratch_operands = 1 : i64, tpu.core_type = #tpu.core_type<tc>, window_params = [{transform_indices = @transform_0, window_bounds = array<i64: 8, 256>}, {transform_indices = @transform_1, window_bounds = array<i64: 8, 1>}, {transform_indices = @transform_2, window_bounds = array<i64: 8, 1>}]} {
    %c0_i32 = arith.constant 0 : i32
    %0 = arith.cmpi eq, %arg1, %c0_i32 : i32
    %1 = arith.extui %0 : i1 to i32
    %c0_i32_0 = arith.constant 0 : i32
    %2 = arith.cmpi ne, %1, %c0_i32_0 : i32
    scf.if %2 {
      %cst_11 = arith.constant 0.000000e+00 : f32
      %19 = vector.broadcast %cst_11 : f32 to vector<8x1xf32>
      %c0_12 = arith.constant 0 : index
      %c0_13 = arith.constant 0 : index
      %20 = vector.load %arg5[%c0_12, %c0_13] : memref<8x1xf32, #tpu.memory_space<vmem>>, vector<8x1xf32>
      tpu.vector_store %arg5[%c0_12, %c0_13], %19 {strides = array<i32>} : memref<8x1xf32, #tpu.memory_space<vmem>>, vector<8x1xf32>,
    } else {
    }
    %c0 = arith.constant 0 : index
    %c0_1 = arith.constant 0 : index
    %3 = vector.load %arg2[%c0, %c0_1] : memref<8x256xf32, #tpu.memory_space<vmem>>, vector<8x256xf32>
    %c0_2 = arith.constant 0 : index
    %c0_3 = arith.constant 0 : index
    %4 = vector.load %arg3[%c0_2, %c0_3] : memref<8x1xf32, #tpu.memory_space<vmem>>, vector<8x1xf32>
    %cst = arith.constant 9.99999997E-7 : f32
    %5 = vector.broadcast %cst : f32 to vector<8x256xf32>
    %6 = arith.maximumf %3, %5 : vector<8x256xf32>
    %7 = math.log %6 : vector<8x256xf32>
    %8 = vector.broadcast %4 : vector<8x1xf32> to vector<8x256xf32>
    %9 = arith.mulf %8, %7 : vector<8x256xf32>
    %10 = math.exp %9 : vector<8x256xf32>
    %c0_4 = arith.constant 0 : index
    %c0_5 = arith.constant 0 : index
    %11 = vector.load %arg5[%c0_4, %c0_5] : memref<8x1xf32, #tpu.memory_space<vmem>>, vector<8x1xf32>
    %cst_6 = arith.constant dense<0.000000e+00> : vector<8xf32>
    %12 = vector.multi_reduction <add>, %10, %cst_6 [1] : vector<8x256xf32> to vector<8xf32>
    %13 = vector.shape_cast %12 : vector<8xf32> to vector<8x1xf32>
    %14 = arith.addf %11, %13 : vector<8x1xf32>
    %c0_7 = arith.constant 0 : index
    %c0_8 = arith.constant 0 : index
    %15 = vector.load %arg5[%c0_7, %c0_8] : memref<8x1xf32, #tpu.memory_space<vmem>>, vector<8x1xf32>
    tpu.vector_store %arg5[%c0_7, %c0_8], %14 {strides = array<i32>} : memref<8x1xf32, #tpu.memory_space<vmem>>, vector<8x1xf32>,
    %c0_i32_9 = arith.constant 0 : i32
    %16 = arith.cmpi eq, %arg1, %c0_i32_9 : i32
    %17 = arith.extui %16 : i1 to i32
    %c0_i32_10 = arith.constant 0 : i32
    %18 = arith.cmpi ne, %17, %c0_i32_10 : i32
    scf.if %18 {
      %c0_11 = arith.constant 0 : index
      %c0_12 = arith.constant 0 : index
      %19 = vector.load %arg5[%c0_11, %c0_12] : memref<8x1xf32, #tpu.memory_space<vmem>>, vector<8x1xf32>
      %cst_13 = arith.constant 3.906250e-03 : f32
      %20 = vector.broadcast %cst_13 : f32 to vector<8x1xf32>
      %21 = arith.mulf %19, %20 : vector<8x1xf32>
      %cst_14 = arith.constant 1.17549435E-38 : f32
      %22 = vector.broadcast %cst_14 : f32 to vector<8x1xf32>
      %23 = arith.maximumf %21, %22 : vector<8x1xf32>
      %24 = tpu.reciprocal %4 : vector<8x1xf32> -> vector<8x1xf32>
      %25 = math.log %23 : vector<8x1xf32>
      %26 = arith.mulf %25, %24 : vector<8x1xf32>
      %27 = math.exp %26 : vector<8x1xf32>
      %c0_15 = arith.constant 0 : index
      %c0_16 = arith.constant 0 : index
      %28 = vector.load %arg4[%c0_15, %c0_16] : memref<8x1xf32, #tpu.memory_space<vmem>>, vector<8x1xf32>
      tpu.vector_store %arg4[%c0_15, %c0_16], %27 {strides = array<i32>} : memref<8x1xf32, #tpu.memory_space<vmem>>, vector<8x1xf32>,
    } else {
    }
    return
  }
  func.func @transform_0(%arg0: i32, %arg1: i32) -> (i32, i32) {
    %c0_i32 = arith.constant 0 : i32
    return %arg0, %arg1 : i32, i32
  }
  func.func @transform_1(%arg0: i32, %arg1: i32) -> (i32, i32) {
    %c0_i32 = arith.constant 0 : i32
    %c0_i32_0 = arith.constant 0 : i32
    return %arg0, %c0_i32 : i32, i32
  }
  func.func @transform_2(%arg0: i32, %arg1: i32) -> (i32, i32) {
    %c0_i32 = arith.constant 0 : i32
    %c0_i32_0 = arith.constant 0 : i32
    return %arg0, %c0_i32 : i32, i32
  }
}

</mosaic_0001>

<llo_original>
// kernel: tpu_custom_call.1
$region0: #{tpu_custom_call.1}
  #allocation0 [shape = 'u32[]', space=smem, size = 0x4, offset = 0x4, fixed_abs, tag = 'smem constant byte address 0x4 - core index']
  #allocation1 [shape = 'u32[144,128]{1,0:T(1,128)}', space=vmem, size = 0x12000, scoped, tag = 'internal scratch']
  #allocation2 [shape = 'f32[8,1]{1,0:T(8,128)}', space=vmem, size = 0x1000, scoped, tag = 'scratch operand']
  %s0 = inlined_call_operand.hbm [shape: f32[8,256], index: 0, kind: input, shape index: {}]
  %s1 = inlined_call_operand.vmem [shape: f32[8,1], index: 1, kind: input, shape index: {}]
  %s2 = inlined_call_operand.vmem [shape: f32[8,1], index: 2, kind: output, shape index: {}]
  %s3 = sld [smem:[#allocation0]]
  $region30: #{tpu_custom_call.1} parent=0
    _
  %s5 = ssub.s32 1, %s3
  %s6 = scalar_select 0, %s5, %s3
  $region1: #{tpu_custom_call.1} parent=0
    #allocation3 [shape = 'u8[8192]{0}', space=vmem, size = 0x2000, scoped, tag = 'input window, operand 0, single buffered']
    #allocation4 [shape = 's32[1]{0}', space=sflag, size = 0x4, scoped, tag = 'scoped memory for tpu_custom_call.1']
    %7 = vsyncpa [#allocation4], 0
    // Predicated region
    $region2: #{tpu_custom_call.1} parent=1 // pred_check
      _
    $region3: #{tpu_custom_call.1} parent=1 // pred_check_branch
      %9 = sbr.rel (0) target = $region5
    $region4: #{tpu_custom_call.1} parent=1 // pred_region
      %s11 = ssub.s32 256, 256
      %12 = vsyncadd [#allocation4], %s11
      %s14 = sshll.u32 [#allocation3], 4
      %s15 = int_to_ptr.vmem [resolvable:$true] %s14
      %17 = dma.hbm_to_vmem [thread:$0]  %s0, 256, %s15, [#allocation4]
    $region5: #{tpu_custom_call.1} parent=1 // pred_fallthru
      _
    // Predicated region
    $region6: #{tpu_custom_call.1} parent=1 // pred_check
      _
    $region7: #{tpu_custom_call.1} parent=1 // pred_check_branch
      %19 = sbr.rel (0) target = $region9
    $region8: #{tpu_custom_call.1} parent=1 // pred_region
      _
    $region9: #{tpu_custom_call.1} parent=1 // pred_fallthru
      _
    // Predicated region
    $region10: #{tpu_custom_call.1} parent=1 // pred_check
      _
    $region11: #{tpu_custom_call.1} parent=1 // pred_check_branch
      %21 = sbr.rel (0) target = $region13
    $region12: #{tpu_custom_call.1} parent=1 // pred_region
      %22 = dma.done [#allocation4], 256
    $region13: #{tpu_custom_call.1} parent=1 // pred_fallthru
      _
    %p23 = scmp.eq.s32.totalorder 0, 0
    // Predicated region
    $region14: #{tpu_custom_call.1} parent=1 // pred_check
      %p24 = pneg %p23
    $region15: #{tpu_custom_call.1} parent=1 // pred_check_branch
      %26 = sbr.rel (%p24) target = $region17
    $region16: #{tpu_custom_call.1} parent=1 // pred_region
      %vm27 = vcmask 7168
      %28 = vst.msk [vmem:[#allocation2] sm:$0xff] %vm27, 0.0
    $region17: #{tpu_custom_call.1} parent=1 // pred_fallthru
      _
    %v29 = vld [vmem:[#allocation3] sm:$0xff]
    %v30 = vld [vmem:[#allocation3 + $0x8] sm:$0xff]
    %v31 = vld [vmem:[%s1] sm:$0xff]
    %v32 = vmax.f32 %v29, 1e-06
    %v33 = vmax.f32 %v30, 1e-06
    %v34 = vlog2.pop %v32
    %v35 = vmul.f32 %v34, 0.6931472
    %v36 = vlog2.pop %v33
    %v37 = vmul.f32 %v36, 0.6931472
    %39 = vset.pattern.permute.xlu0 0
    %40 = vperm.xlu0 %39, %v31
    %v41 = vpop.permute.xlu0 %40
    %v43 = vmul.f32 %v41, %v35
    %v44 = vmul.f32 %v41, %v37
    %v45 = vmul.f32 %v43, 1.442695
    %v46 = vpow.pop %v45
    %v47 = vmul.f32 %v44, 1.442695
    %v48 = vpow.pop %v47
    %v49 = vld [vmem:[#allocation2] sm:$0xff]
    %v50 = vadd.f32 %v46, %v48
    %51 = vadd.xlane.f32.xlu0 %v50
    %v52 = vpop.xlane.xlu0 %51
    %v53 = vadd.f32 %v49, %v52
    %vm54 = vcmask 7168
    %55 = vst.msk [vmem:[#allocation2] sm:$0xff] %vm54, %v53
    // Predicated region
    $region18: #{tpu_custom_call.1} parent=1 // pred_check
      %p56 = pneg %p23
    $region19: #{tpu_custom_call.1} parent=1 // pred_check_branch
      %58 = sbr.rel (%p56) target = $region21
    $region20: #{tpu_custom_call.1} parent=1 // pred_region
      %v59 = vld [vmem:[#allocation2] sm:$0xff]
      %v60 = vmul.f32 %v59, 0.00390625
      %v61 = vmax.f32 %v60, 1.1754944e-38
      %v62 = vrcp.pop %v31
      %v63 = vlog2.pop %v61
      %v64 = vmul.f32 %v63, 0.6931472
      %v65 = vmul.f32 %v64, %v62
      %v66 = vmul.f32 %v65, 1.442695
      %v67 = vpow.pop %v66
      %68 = vst.msk [vmem:[%s2] sm:$0xff] %vm54, %v67
    $region21: #{tpu_custom_call.1} parent=1 // pred_fallthru
      _
    // Predicated region
    $region22: #{tpu_custom_call.1} parent=1 // pred_check
      _
    $region23: #{tpu_custom_call.1} parent=1 // pred_check_branch
      %70 = sbr.rel (0) target = $region25
    $region24: #{tpu_custom_call.1} parent=1 // pred_region
      _
    $region25: #{tpu_custom_call.1} parent=1 // pred_fallthru
      _
    // Predicated region
    $region26: #{tpu_custom_call.1} parent=1 // pred_check
      _
    $region27: #{tpu_custom_call.1} parent=1 // pred_check_branch
      %72 = sbr.rel (0) target = $region29
    $region28: #{tpu_custom_call.1} parent=1 // pred_region
      _
    $region29: #{tpu_custom_call.1} parent=1 // pred_fallthru
      _
    %73 = vsyncpa [#allocation4], 1

</llo_original>
